<compile_context>
chip_gen: v5e
topology: v5e:2x2
jax: 0.10.0
libtpu: 0.0.40
codegen_flags: <defaults>
</compile_context>

<pallas_src>
import functools

import jax
import jax.numpy as jnp
from jax import lax
from jax.experimental import pallas as pl
from jax.experimental.pallas import tpu as pltpu

LN_EPS = 1e-5  # nn.LayerNorm default


def _round_up(a: int, b: int) -> int:
    return (a + b - 1) // b * b


def _prenorm_linear_kernel(x_ref, g_ref, b_ref, w_ref, wb_ref, o_ref, y_ref,
                           *, d_real: int):
    """LayerNorm(x) over last dim (cached in VMEM), then y @ W_tile + bias."""
    j = pl.program_id(1)  # DOUT-tile axis (inner, "arbitrary")

    # Compute the normalized rows once per row tile, reuse for every DOUT tile.
    @pl.when(j == 0)
    def _():
        x = x_ref[...].astype(jnp.float32)            # (RB, Dp)
        gamma = g_ref[...].astype(jnp.float32)        # (1, Dp)  (zero-padded)
        beta = b_ref[...].astype(jnp.float32)         # (1, Dp)  (zero-padded)

        d_pad = x.shape[-1]
        padded = d_pad != d_real
        if padded:
            col = lax.broadcasted_iota(jnp.int32, x.shape, dimension=1)
            valid = col < d_real
            x = jnp.where(valid, x, 0.0)

        inv_d = jnp.float32(1.0 / d_real)
        mean = jnp.sum(x, axis=-1, keepdims=True) * inv_d     # (RB, 1)
        xc = x - mean
        if padded:
            xc = jnp.where(valid, xc, 0.0)
        var = jnp.sum(xc * xc, axis=-1, keepdims=True) * inv_d  # biased (torch)
        inv = lax.rsqrt(var + LN_EPS)                           # EUP

        y = xc * (inv * gamma) + beta                 # padded cols -> 0
        y_ref[...] = y.astype(y_ref.dtype)            # bf16 for the MXU

    y = y_ref[...]                                    # (RB, Dp)  bf16
    w = w_ref[...]                                    # (Dp, TN)  bf16
    wb = wb_ref[...].astype(jnp.float32)              # (1, TN)

    out = jnp.dot(y, w, preferred_element_type=jnp.float32) + wb
    o_ref[...] = out.astype(o_ref.dtype)


@functools.partial(jax.jit, static_argnames=("row_block", "dout_block"))
def prenorm_linear(x, gamma, beta, w, wbias, *, row_block=256, dout_block=512):
    """PreNorm(dim, fn=Linear(dim, dout)) forward.

    x:      (B, N, D)
    gamma:  (D,)     LayerNorm weight
    beta:   (D,)     LayerNorm bias
    w:      (D, DOUT) fn (Linear) weight in matmul layout
    wbias:  (DOUT,)   fn (Linear) bias
    returns (B, N, DOUT)
    """
    B, N, D = x.shape
    D_w, DOUT = w.shape
    assert D_w == D
    rows = B * N

    lane = 128
    x_bytes = jnp.dtype(x.dtype).itemsize
    sublane = max(8, 32 // x_bytes)                   # 8 f32, 16 bf16, 32 i8

    # Padded feature / output dims (lane-dense output stores).
    D_p = _round_up(D, lane)
    DOUT_p = _round_up(DOUT, lane)
    tn = min(dout_block, DOUT_p)
    DOUT_p = _round_up(DOUT_p, tn)

    # Row tile: as large as requested but never bigger than (padded) rows.
    rb = min(row_block, _round_up(rows, sublane))
    rb = _round_up(rb, sublane)
    rows_p = _round_up(rows, rb)

    # Pad inputs (zeros). gamma/beta/w padded with zeros keep padded output
    # columns / padded feature columns exactly zero.
    x2 = x.reshape(rows, D)
    if rows_p != rows or D_p != D:
        x2 = jnp.pad(x2, ((0, rows_p - rows), (0, D_p - D)))
    g2 = jnp.pad(gamma.astype(jnp.float32), (0, D_p - D)).reshape(1, D_p)
    b2 = jnp.pad(beta.astype(jnp.float32), (0, D_p - D)).reshape(1, D_p)
    w2 = jnp.pad(w, ((0, D_p - D), (0, DOUT_p - DOUT))).astype(jnp.bfloat16)
    wb2 = jnp.pad(wbias.astype(jnp.float32), (0, DOUT_p - DOUT)).reshape(1, DOUT_p)

    grid = (rows_p // rb, DOUT_p // tn)

    # VMEM budget: double-buffered x / w / out tiles + LN scratch (+ headroom),
    # clamped to stay within v7x's 64 MiB VMEM.
    est = (2 * rb * D_p * x_bytes          # x tiles (double-buffered)
           + 2 * 2 * D_p * 4               # gamma, beta
           + 2 * D_p * tn * 2              # bf16 weight tiles
           + 2 * tn * 4                    # bias tile
           + 2 * rb * tn * x_bytes         # output tiles
           + rb * D_p * 2)                 # bf16 LN scratch
    vmem_limit = int(min(48 * 1024 * 1024, max(32 * 1024 * 1024, 2 * est)))

    kernel = functools.partial(_prenorm_linear_kernel, d_real=D)

    out = pl.pallas_call(
        kernel,
        out_shape=jax.ShapeDtypeStruct((rows_p, DOUT_p), x.dtype),
        grid_spec=pltpu.PrefetchScalarGridSpec(
            num_scalar_prefetch=0,
            grid=grid,
            in_specs=[
                pl.BlockSpec((rb, D_p), lambda i, j: (i, 0)),    # x rows tile
                pl.BlockSpec((1, D_p), lambda i, j: (0, 0)),     # gamma
                pl.BlockSpec((1, D_p), lambda i, j: (0, 0)),     # beta
                pl.BlockSpec((D_p, tn), lambda i, j: (0, j)),    # weight tile
                pl.BlockSpec((1, tn), lambda i, j: (0, j)),      # bias tile
            ],
            out_specs=pl.BlockSpec((rb, tn), lambda i, j: (i, j)),
            scratch_shapes=[pltpu.VMEM((rb, D_p), jnp.bfloat16)],  # LN result
        ),
        compiler_params=pltpu.CompilerParams(
            dimension_semantics=("parallel", "arbitrary"),
            vmem_limit_bytes=vmem_limit,
        ),
    )(x2, g2, b2, w2, wb2)

    return out[:rows, :DOUT].reshape(B, N, DOUT)


def _reference(x, gamma, beta, w, wbias):
    """Mirrors the kernel's mixed precision: f32 LN stats, bf16 MXU, f32 acc."""
    xf = x.astype(jnp.float32)
    mean = jnp.mean(xf, axis=-1, keepdims=True)
    var = jnp.mean((xf - mean) ** 2, axis=-1, keepdims=True)
    y = (xf - mean) * lax.rsqrt(var + LN_EPS) * gamma + beta
    out = jnp.dot(y.astype(jnp.bfloat16), w.astype(jnp.bfloat16),
                  preferred_element_type=jnp.float32) + wbias
    return out.astype(x.dtype)


if __name__ == "__main__":
    key = jax.random.PRNGKey(0)
    # Small but lane/MXU-friendly demo shapes (D, DOUT multiples of 128).
    B, N, D, DOUT = 2, 8, 128, 128

    kx, kw, kb = jax.random.split(key, 3)
    x = jax.random.normal(kx, (B, N, D), dtype=jnp.float32)

    # nn.LayerNorm default init: weight=1, bias=0
    gamma = jnp.ones((D,), dtype=jnp.float32)
    beta = jnp.zeros((D,), dtype=jnp.float32)
    # fn = Linear(D, DOUT): deterministic small random weights
    w = jax.random.normal(kw, (D, DOUT), dtype=jnp.float32) / jnp.sqrt(D)
    wbias = jax.random.normal(kb, (DOUT,), dtype=jnp.float32) * 0.01

    out = prenorm_linear(x, gamma, beta, w, wbias)
    jax.block_until_ready(out)

    ref = _reference(x, gamma, beta, w, wbias)
    assert out.shape == (B, N, DOUT)
    assert jnp.allclose(out, ref, atol=1e-2, rtol=1e-2), "mismatch vs reference"

    # TODO(synk): `fn` is an arbitrary callable in the PyTorch module; here it
    # is instantiated as Linear(dim, dout). Other fns (Attention/FeedForward)
    # would be separate fused kernels.
    print("KERNEL_OK")
</pallas_src>

<mosaic_0001>
module attributes {stable_mosaic.version = 11 : i64} {
  func.func @_prenorm_linear_kernel(%arg0: i32, %arg1: i32, %arg2: memref<16x128xf32, #tpu.memory_space<vmem>>, %arg3: memref<1x128xf32, #tpu.memory_space<vmem>>, %arg4: memref<1x128xf32, #tpu.memory_space<vmem>>, %arg5: memref<128x128xbf16, #tpu.memory_space<vmem>>, %arg6: memref<1x128xf32, #tpu.memory_space<vmem>>, %arg7: memref<16x128xf32, #tpu.memory_space<vmem>>, %arg8: memref<16x128xbf16, #tpu.memory_space<vmem>>) attributes {dimension_semantics = [#tpu.dimension_semantics<parallel>, #tpu.dimension_semantics<arbitrary>], iteration_bounds = array<i64: 1, 1>, scalar_prefetch = 0 : i64, scratch_operands = 1 : i64, tpu.core_type = #tpu.core_type<tc>, window_params = [{transform_indices = @transform_0, window_bounds = array<i64: 16, 128>}, {pipeline_mode = #tpu.pipeline_mode<synchronous>, transform_indices = @transform_1, window_bounds = array<i64: 1, 128>}, {pipeline_mode = #tpu.pipeline_mode<synchronous>, transform_indices = @transform_2, window_bounds = array<i64: 1, 128>}, {transform_indices = @transform_3, window_bounds = array<i64: 128, 128>}, {transform_indices = @transform_4, window_bounds = array<i64: 1, 128>}, {transform_indices = @transform_5, window_bounds = array<i64: 16, 128>}]} {
    %c0_i32 = arith.constant 0 : i32
    %0 = arith.cmpi eq, %arg1, %c0_i32 : i32
    %1 = arith.extui %0 : i1 to i32
    %c0_i32_0 = arith.constant 0 : i32
    %2 = arith.cmpi ne, %1, %c0_i32_0 : i32
    scf.if %2 {
      %c0_8 = arith.constant 0 : index
      %c0_9 = arith.constant 0 : index
      %10 = vector.load %arg2[%c0_8, %c0_9] : memref<16x128xf32, #tpu.memory_space<vmem>>, vector<16x128xf32>
      %c0_10 = arith.constant 0 : index
      %c0_11 = arith.constant 0 : index
      %11 = vector.load %arg3[%c0_10, %c0_11] : memref<1x128xf32, #tpu.memory_space<vmem>>, vector<1x128xf32>
      %c0_12 = arith.constant 0 : index
      %c0_13 = arith.constant 0 : index
      %12 = vector.load %arg4[%c0_12, %c0_13] : memref<1x128xf32, #tpu.memory_space<vmem>>, vector<1x128xf32>
      %cst_14 = arith.constant dense<0.000000e+00> : vector<16xf32>
      %13 = vector.multi_reduction <add>, %10, %cst_14 [1] : vector<16x128xf32> to vector<16xf32>
      %14 = vector.shape_cast %13 : vector<16xf32> to vector<16x1xf32>
      %cst_15 = arith.constant 7.812500e-03 : f32
      %15 = vector.broadcast %cst_15 : f32 to vector<16x1xf32>
      %16 = arith.mulf %14, %15 : vector<16x1xf32>
      %17 = vector.broadcast %16 : vector<16x1xf32> to vector<16x128xf32>
      %18 = arith.subf %10, %17 : vector<16x128xf32>
      %19 = arith.mulf %18, %18 : vector<16x128xf32>
      %cst_16 = arith.constant dense<0.000000e+00> : vector<16xf32>
      %20 = vector.multi_reduction <add>, %19, %cst_16 [1] : vector<16x128xf32> to vector<16xf32>
      %21 = vector.shape_cast %20 : vector<16xf32> to vector<16x1xf32>
      %cst_17 = arith.constant 7.812500e-03 : f32
      %22 = vector.broadcast %cst_17 : f32 to vector<16x1xf32>
      %23 = arith.mulf %21, %22 : vector<16x1xf32>
      %cst_18 = arith.constant 9.99999974E-6 : f32
      %24 = vector.broadcast %cst_18 : f32 to vector<16x1xf32>
      %25 = arith.addf %23, %24 : vector<16x1xf32>
      %26 = math.rsqrt %25 : vector<16x1xf32>
      %27 = vector.broadcast %26 : vector<16x1xf32> to vector<16x128xf32>
      %28 = vector.broadcast %11 : vector<1x128xf32> to vector<16x128xf32>
      %29 = arith.mulf %27, %28 : vector<16x128xf32>
      %30 = arith.mulf %18, %29 : vector<16x128xf32>
      %31 = vector.broadcast %12 : vector<1x128xf32> to vector<16x128xf32>
      %32 = arith.addf %30, %31 : vector<16x128xf32>
      %33 = arith.truncf %32 : vector<16x128xf32> to vector<16x128xbf16>
      %c0_19 = arith.constant 0 : index
      %c0_20 = arith.constant 0 : index
      %34 = vector.load %arg8[%c0_19, %c0_20] : memref<16x128xbf16, #tpu.memory_space<vmem>>, vector<16x128xbf16>
      tpu.vector_store %arg8[%c0_19, %c0_20], %33 {strides = array<i32>} : memref<16x128xbf16, #tpu.memory_space<vmem>>, vector<16x128xbf16>,
    } else {
    }
    %c0 = arith.constant 0 : index
    %c0_1 = arith.constant 0 : index
    %3 = vector.load %arg8[%c0, %c0_1] : memref<16x128xbf16, #tpu.memory_space<vmem>>, vector<16x128xbf16>
    %c0_2 = arith.constant 0 : index
    %c0_3 = arith.constant 0 : index
    %4 = vector.load %arg5[%c0_2, %c0_3] : memref<128x128xbf16, #tpu.memory_space<vmem>>, vector<128x128xbf16>
    %c0_4 = arith.constant 0 : index
    %c0_5 = arith.constant 0 : index
    %5 = vector.load %arg6[%c0_4, %c0_5] : memref<1x128xf32, #tpu.memory_space<vmem>>, vector<1x128xf32>
    %cst = arith.constant dense<0.000000e+00> : vector<16x128xf32>
    %6 = tpu.matmul %3, %4, %cst {dimension_numbers = #tpu.dot_dimension_numbers<[1], [0], [0], [1], [0, 0, 1, 1], [], []>} : vector<16x128xbf16>, vector<128x128xbf16>, vector<16x128xf32> -> vector<16x128xf32>
    %7 = vector.broadcast %5 : vector<1x128xf32> to vector<16x128xf32>
    %8 = arith.addf %6, %7 : vector<16x128xf32>
    %c0_6 = arith.constant 0 : index
    %c0_7 = arith.constant 0 : index
    %9 = vector.load %arg7[%c0_6, %c0_7] : memref<16x128xf32, #tpu.memory_space<vmem>>, vector<16x128xf32>
    tpu.vector_store %arg7[%c0_6, %c0_7], %8 {strides = array<i32>} : memref<16x128xf32, #tpu.memory_space<vmem>>, vector<16x128xf32>,
    return
  }
  func.func @transform_0(%arg0: i32, %arg1: i32) -> (i32, i32) {
    %c0_i32 = arith.constant 0 : i32
    %c0_i32_0 = arith.constant 0 : i32
    return %arg0, %c0_i32 : i32, i32
  }
  func.func @transform_1(%arg0: i32, %arg1: i32) -> (i32, i32) {
    %c0_i32 = arith.constant 0 : i32
    %c0_i32_0 = arith.constant 0 : i32
    %c0_i32_1 = arith.constant 0 : i32
    return %c0_i32, %c0_i32_0 : i32, i32
  }
  func.func @transform_2(%arg0: i32, %arg1: i32) -> (i32, i32) {
    %c0_i32 = arith.constant 0 : i32
    %c0_i32_0 = arith.constant 0 : i32
    %c0_i32_1 = arith.constant 0 : i32
    return %c0_i32, %c0_i32_0 : i32, i32
  }
  func.func @transform_3(%arg0: i32, %arg1: i32) -> (i32, i32) {
    %c0_i32 = arith.constant 0 : i32
    %c0_i32_0 = arith.constant 0 : i32
    return %c0_i32, %arg1 : i32, i32
  }
  func.func @transform_4(%arg0: i32, %arg1: i32) -> (i32, i32) {
    %c0_i32 = arith.constant 0 : i32
    %c0_i32_0 = arith.constant 0 : i32
    return %c0_i32, %arg1 : i32, i32
  }
  func.func @transform_5(%arg0: i32, %arg1: i32) -> (i32, i32) {
    %c0_i32 = arith.constant 0 : i32
    return %arg0, %arg1 : i32, i32
  }
}

</mosaic_0001>

<llo_original>
// kernel: prenorm_linear.1
$region0: #{prenorm_linear.1}
  #allocation0 [shape = 'u32[]', space=smem, size = 0x4, offset = 0x4, fixed_abs, tag = 'smem constant byte address 0x4 - core index']
  #allocation1 [shape = 'u32[72,128]{1,0:T(1,128)}', space=vmem, size = 0x9000, scoped, tag = 'internal scratch']
  #allocation2 [shape = 'bf16[16,128]{1,0:T(8,128)(2,1)}', space=vmem, size = 0x1000, scoped, tag = 'scratch operand']
  %s0 = inlined_call_operand.vmem [shape: f32[16,128], index: 0, kind: input, shape index: {}]
  %s1 = inlined_call_operand.vmem [shape: f32[1,128], index: 1, kind: input, shape index: {}]
  %s2 = inlined_call_operand.vmem [shape: f32[1,128], index: 2, kind: input, shape index: {}]
  %s3 = inlined_call_operand.vmem [shape: bf16[128,128], index: 3, kind: input, shape index: {}]
  %s4 = inlined_call_operand.vmem [shape: f32[1,128], index: 4, kind: input, shape index: {}]
  %s5 = inlined_call_operand.hbm [shape: f32[16,128], index: 5, kind: output, shape index: {}]
  %s6 = sld [smem:[#allocation0]]
  $region34: #{prenorm_linear.1} parent=0
    _
  %s8 = ssub.s32 1, %s6
  %s9 = scalar_select 0, %s8, %s6
  $region1: #{prenorm_linear.1} parent=0
    #allocation3 [shape = 'u8[8192]{0}', space=vmem, size = 0x2000, scoped, tag = 'output window, operand 0, single buffered']
    #allocation4 [shape = 's32[1]{0}', space=sflag, size = 0x4, scoped, tag = 'scoped memory for prenorm_linear.1']
    %10 = vsyncpa [#allocation4], 0
    // Predicated region
    $region2: #{prenorm_linear.1} parent=1 // pred_check
      _
    $region3: #{prenorm_linear.1} parent=1 // pred_check_branch
      %12 = sbr.rel (0) target = $region5
    $region4: #{prenorm_linear.1} parent=1 // pred_region
      _
    $region5: #{prenorm_linear.1} parent=1 // pred_fallthru
      _
    // Predicated region
    $region6: #{prenorm_linear.1} parent=1 // pred_check
      _
    $region7: #{prenorm_linear.1} parent=1 // pred_check_branch
      %14 = sbr.rel (0) target = $region9
    $region8: #{prenorm_linear.1} parent=1 // pred_region
      _
    $region9: #{prenorm_linear.1} parent=1 // pred_fallthru
      _
    // Predicated region
    $region10: #{prenorm_linear.1} parent=1 // pred_check
      _
    $region11: #{prenorm_linear.1} parent=1 // pred_check_branch
      %16 = sbr.rel (0) target = $region13
    $region12: #{prenorm_linear.1} parent=1 // pred_region
      _
    $region13: #{prenorm_linear.1} parent=1 // pred_fallthru
      _
    // Predicated region
    $region14: #{prenorm_linear.1} parent=1 // pred_check
      _
    $region15: #{prenorm_linear.1} parent=1 // pred_check_branch
      %18 = sbr.rel (0) target = $region17
    $region16: #{prenorm_linear.1} parent=1 // pred_region
      _
    $region17: #{prenorm_linear.1} parent=1 // pred_fallthru
      _
    // Predicated region
    $region18: #{prenorm_linear.1} parent=1 // pred_check
      _
    $region19: #{prenorm_linear.1} parent=1 // pred_check_branch
      %20 = sbr.rel (0) target = $region21
    $region20: #{prenorm_linear.1} parent=1 // pred_region
      _
    $region21: #{prenorm_linear.1} parent=1 // pred_fallthru
      _
    %p21 = scmp.eq.s32.totalorder 0, 0
    // Predicated region
    $region22: #{prenorm_linear.1} parent=1 // pred_check
      %p22 = pneg %p21
    $region23: #{prenorm_linear.1} parent=1 // pred_check_branch
      %24 = sbr.rel (%p22) target = $region25
    $region24: #{prenorm_linear.1} parent=1 // pred_region
      %v25 = vld [vmem:[%s0] sm:$0xff]
      %v26 = vld [vmem:[%s0 + $0x8] sm:$0xff]
      %v27 = vld [vmem:[%s1] sm:$0x1]
      %v28 = vld [vmem:[%s2] sm:$0x1]
      %29 = vadd.xlane.f32.xlu0 %v25
      %v30 = vpop.xlane.xlu0 %29
      %31 = vadd.xlane.f32.xlu0 %v26
      %v32 = vpop.xlane.xlu0 %31
      %v33 = vmul.f32 %v30, 0.0078125
      %v34 = vmul.f32 %v32, 0.0078125
      %v35 = vsub.f32 %v25, %v33
      %v36 = vsub.f32 %v26, %v34
      %v37 = vmul.f32 %v35, %v35
      %v38 = vmul.f32 %v36, %v36
      %39 = vadd.xlane.f32.xlu0 %v37
      %v40 = vpop.xlane.xlu0 %39
      %41 = vadd.xlane.f32.xlu0 %v38
      %v42 = vpop.xlane.xlu0 %41
      %v43 = vmul.f32 %v40, 0.0078125
      %v44 = vmul.f32 %v42, 0.0078125
      %v45 = vadd.f32 %v43, 1e-05
      %v46 = vadd.f32 %v44, 1e-05
      %v47 = vrsqrt.pop %v45
      %v48 = vmul.f32 %v47, %v45
      %v49 = vmul.f32 %v48, %v47
      %v50 = vmul.f32 0.5, %v49
      %v51 = vsub.f32 1.5, %v50
      %v52 = vmul.f32 %v47, %v51
      %vm53 = vweird.f32 %v45
      %vm54 = vweird.f32 %v47
      %vm55 = vmor %vm53, %vm54
      %v56 = vsel %vm55, %v47, %v52
      %v57 = vrsqrt.pop %v46
      %v58 = vmul.f32 %v57, %v46
      %v59 = vmul.f32 %v58, %v57
      %v60 = vmul.f32 0.5, %v59
      %v61 = vsub.f32 1.5, %v60
      %v62 = vmul.f32 %v57, %v61
      %vm63 = vweird.f32 %v46
      %vm64 = vweird.f32 %v57
      %vm65 = vmor %vm63, %vm64
      %v66 = vsel %vm65, %v57, %v62
      %v68 = vperm.slane %v27, 0
      %v70 = vmul.f32 %v56, %v68
      %v71 = vmul.f32 %v66, %v68
      %v72 = vmul.f32 %v35, %v70
      %v73 = vmul.f32 %v36, %v71
      %v75 = vperm.slane %v28, 0
      %v77 = vadd.f32 %v72, %v75
      %v78 = vadd.f32 %v73, %v75
      %v79 = vpack.c.bf16 %v77, %v77
      %v80 = vpack.c.bf16 %v78, %v78
      %81 = vst [vmem:[#allocation2] sm:$0xf] %v79
      %82 = vst [vmem:[#allocation2 + $0x4] sm:$0xf] %v80
    $region25: #{prenorm_linear.1} parent=1 // pred_fallthru
      _
    %v83 = vld [vmem:[#allocation2] sm:$0xf]
    %v84 = vld [vmem:[#allocation2 + $0x4] sm:$0xf]
    %v85 = vld [vmem:[%s3] sm:$0xf]
    %v86 = vld [vmem:[%s3 + $0x4] sm:$0xf]
    %v87 = vld [vmem:[%s3 + $0x8] sm:$0xf]
    %v88 = vld [vmem:[%s3 + $0xc] sm:$0xf]
    %v89 = vld [vmem:[%s3 + $0x10] sm:$0xf]
    %v90 = vld [vmem:[%s3 + $0x14] sm:$0xf]
    %v91 = vld [vmem:[%s3 + $0x18] sm:$0xf]
    %v92 = vld [vmem:[%s3 + $0x1c] sm:$0xf]
    %v93 = vld [vmem:[%s3 + $0x20] sm:$0xf]
    %v94 = vld [vmem:[%s3 + $0x24] sm:$0xf]
    %v95 = vld [vmem:[%s3 + $0x28] sm:$0xf]
    %v96 = vld [vmem:[%s3 + $0x2c] sm:$0xf]
    %v97 = vld [vmem:[%s3 + $0x30] sm:$0xf]
    %v98 = vld [vmem:[%s3 + $0x34] sm:$0xf]
    %v99 = vld [vmem:[%s3 + $0x38] sm:$0xf]
    %v100 = vld [vmem:[%s3 + $0x3c] sm:$0xf]
    %v101 = vld [vmem:[%s4] sm:$0x1]
    %v103 = vperm.slane %v101, 0
    %v107 = vunpack.c.l.b16 %v83
    %v108 = vunpack.c.l.b16 %v84
    %v109 = vpack.c.b16 %v108, %v107
    %v127 = vunpack.c.l.b16 %v85
    %v128 = vunpack.c.l.b16 %v86
    %v129 = vunpack.c.l.b16 %v87
    %v130 = vunpack.c.l.b16 %v88
    %v131 = vunpack.c.l.b16 %v89
    %v132 = vunpack.c.l.b16 %v90
    %v133 = vunpack.c.l.b16 %v91
    %v134 = vunpack.c.l.b16 %v92
    %v135 = vunpack.c.l.b16 %v93
    %v136 = vunpack.c.l.b16 %v94
    %v137 = vunpack.c.l.b16 %v95
    %v138 = vunpack.c.l.b16 %v96
    %v139 = vunpack.c.l.b16 %v97
    %v140 = vunpack.c.l.b16 %v98
    %v141 = vunpack.c.l.b16 %v99
    %v142 = vunpack.c.l.b16 %v100
    %v143 = vpack.c.b16 %v128, %v127
    %v144 = vpack.c.b16 %v130, %v129
    %v145 = vpack.c.b16 %v132, %v131
    %v146 = vpack.c.b16 %v134, %v133
    %v147 = vpack.c.b16 %v136, %v135
    %v148 = vpack.c.b16 %v138, %v137
    %v149 = vpack.c.b16 %v140, %v139
    %v150 = vpack.c.b16 %v142, %v141
    %159 = vmatpush.bf16.msra.mxu0 %v150
    %160 = vmatpush.bf16.msra.mxu0 %v149
    %161 = vmatpush.bf16.msra.mxu0 %v148
    %162 = vmatpush.bf16.msra.mxu0 %v147
    %163 = vmatpush.bf16.msra.mxu0 %v146
    %164 = vmatpush.bf16.msra.mxu0 %v145
    %165 = vmatpush.bf16.msra.mxu0 %v144
    %166 = vmatpush.bf16.msra.mxu0 %v143
    %167 = vmatmul.bf16.gmra.mxu0 %v109
    %v168 = vpop.f32.mrf.mxu0
    %v169 = vadd.f32 %v103, %v168
    %v170 = vpop.f32.mrf.mxu0
    %v171 = vadd.f32 %v103, %v170
    %172 = vdwg.mxu0
    %173 = vst [vmem:[#allocation3] sm:$0xff] %v169
    %174 = vst [vmem:[#allocation3 + $0x8] sm:$0xff] %v171
    // Predicated region
    $region26: #{prenorm_linear.1} parent=1 // pred_check
      _
    $region27: #{prenorm_linear.1} parent=1 // pred_check_branch
      %176 = sbr.rel (0) target = $region29
    $region28: #{prenorm_linear.1} parent=1 // pred_region
      %178 = vsyncadd [#allocation4], 0
      %s179 = sshll.u32 [#allocation3], 4
      %s180 = int_to_ptr.vmem [resolvable:$true] %s179
      %s181 = sshll.u32 %s5, 4
      %s182 = int_to_ptr.hbm [resolvable:$true] %s181
      %187 = dma.vmem_to_hbm [thread:$0]  %s180, 256, %s182, [#allocation4], 128, 128, 8
    $region29: #{prenorm_linear.1} parent=1 // pred_fallthru
      _
    // Predicated region
    $region30: #{prenorm_linear.1} parent=1 // pred_check
      _
    $region31: #{prenorm_linear.1} parent=1 // pred_check_branch
      %189 = sbr.rel (0) target = $region33
    $region32: #{prenorm_linear.1} parent=1 // pred_region
      %191 = dma.done [#allocation4], 256
    $region33: #{prenorm_linear.1} parent=1 // pred_fallthru
      _
    %192 = vsyncpa [#allocation4], 1

</llo_original>
